<compile_context>
chip_gen: v7x
topology: tpu7x:2x2x1
jax: 0.10.0
libtpu: 0.0.40
codegen_flags: <defaults>
</compile_context>

<pallas_src>
import functools

import jax
import jax.numpy as jnp
from jax import lax
from jax.experimental import pallas as pl
from jax.experimental.pallas import tpu as pltpu


def dqn_kernel(xT_ref, w1_ref, b1_ref, w2_ref, b2_ref, oT_ref, *,
               lane_chunk, layer1_on_mxu):
    # ---- Hoisted once per grid step (loads / slices are NOT CSE'd in loops).
    w1 = w1_ref[...].astype(jnp.float32)                 # [64, 4]
    w1c = [w1[:, k:k + 1] for k in range(w1.shape[1])]   # 4x [64, 1] columns
    b1 = b1_ref[...].astype(jnp.float32)                 # [64, 1]
    w2 = w2_ref[...].astype(jnp.float32)                 # [4, 64]
    b2 = b2_ref[...].astype(jnp.float32)                 # [4, 1]

    tb = oT_ref.shape[-1]
    n_chunks = tb // lane_chunk

    def body(c, carry):
        off = pl.multiple_of(c * lane_chunk, lane_chunk)
        xT = xT_ref[:, pl.ds(off, lane_chunk)].astype(jnp.float32)    # [4, C]

        if layer1_on_mxu:
            # Optional: trade wasted-but-idle MXU cycles for VALU slots.
            h = jnp.dot(w1, xT, preferred_element_type=jnp.float32)   # [64, C]
        else:
            # Layer 1: Linear(4 -> 64) as 4 VPU broadcast-FMAs (outer products).
            h = w1c[0] * xT[0:1, :]
            h = h + w1c[1] * xT[1:2, :]
            h = h + w1c[2] * xT[2:3, :]
            h = h + w1c[3] * xT[3:4, :]
        h = jnp.maximum(h + b1, 0.0)                                  # [64, C]

        # Layer 2: Linear(64 -> 4) on the MXU (K=64, lane-dense N=C).
        out = jnp.dot(w2, h, preferred_element_type=jnp.float32) + b2  # [4, C]
        oT_ref[:, pl.ds(off, lane_chunk)] = out.astype(oT_ref.dtype)
        return carry

    unroll = 2 if (n_chunks >= 2 and n_chunks % 2 == 0) else 1
    lax.fori_loop(0, n_chunks, body, 0, unroll=unroll)


def dqn_forward_t(xT, w1, b1, w2, b2, *, block_b=32768, bf16_io=False,
                  layer1_on_mxu=False):
    """Fast path: activations stay [features, batch] (batch on the lane axis).

    xT: [4, B] -> returns [4, B]. Using this convention end-to-end avoids the
    wrapper XLA transposes that the torch-style [B, 4] interface needs.
    """
    in_dim, B = xT.shape
    hid = w1.shape[0]
    out_dim = w2.shape[0]

    # Batch tile: multiple of 128 lanes, as large as block_b allows (amortize
    # per-step overhead), but keep >=2 grid steps when possible so v7x megacore
    # can split the "parallel" batch axis across its two TensorCores.
    B128 = max(128, pl.cdiv(B, 128) * 128)
    TB = max(128, (min(block_b, B128) // 128) * 128)
    if TB >= B128 and B128 >= 256:
        TB = max(128, (B128 // 2 // 128) * 128)
    B_pad = pl.cdiv(B, TB) * TB

    # In-kernel lane-chunk: keeps h=[64,chunk] (+ FMA temps) within 64 vregs.
    chunk = 256 if TB % 256 == 0 else 128

    io_dtype = jnp.bfloat16 if bf16_io else xT.dtype
    xT = xT.astype(io_dtype)
    if B_pad != B:
        xT = jnp.pad(xT, ((0, 0), (0, B_pad - B)))

    kernel = functools.partial(dqn_kernel, lane_chunk=chunk,
                               layer1_on_mxu=layer1_on_mxu)

    outT = pl.pallas_call(
        kernel,
        out_shape=jax.ShapeDtypeStruct((out_dim, B_pad), io_dtype),
        grid=(B_pad // TB,),
        in_specs=[
            pl.BlockSpec((in_dim, TB), lambda i: (0, i)),     # x tile, lane-dense
            pl.BlockSpec((hid, in_dim), lambda i: (0, 0)),    # w1, VMEM-resident
            pl.BlockSpec((hid, 1), lambda i: (0, 0)),         # b1
            pl.BlockSpec((out_dim, hid), lambda i: (0, 0)),   # w2
            pl.BlockSpec((out_dim, 1), lambda i: (0, 0)),     # b2
        ],
        out_specs=pl.BlockSpec((out_dim, TB), lambda i: (0, i)),
        compiler_params=pltpu.CompilerParams(
            dimension_semantics=("parallel",),        # shard batch across TCs (v7x)
            vmem_limit_bytes=32 * 1024 * 1024,        # ~2 MB needed at TB=32768; safe headroom
        ),
    )(xT, w1, b1.reshape(hid, 1), w2, b2.reshape(out_dim, 1))

    return outT[:, :B]


def dqn_forward(x, w1, b1, w2, b2, **kwargs):
    """Torch-compatible interface: x [B, 4] -> [B, 4].

    Note: x.T / out.T below are separate XLA passes over HBM; for best
    end-to-end throughput keep activations in [features, batch] and call
    dqn_forward_t directly.
    """
    outT = dqn_forward_t(x.T, w1, b1, w2, b2, **kwargs)
    return outT.T


def init_params(key):
    # Deterministic init mimicking torch.nn.Linear default:
    # U(-1/sqrt(fan_in), 1/sqrt(fan_in)); torch layout [out_features, in_features].
    k1, k2, k3, k4 = jax.random.split(key, 4)
    bound1 = 1.0 / jnp.sqrt(4.0)
    bound2 = 1.0 / jnp.sqrt(64.0)
    w1 = jax.random.uniform(k1, (64, 4), jnp.float32, -bound1, bound1)
    b1 = jax.random.uniform(k2, (64,), jnp.float32, -bound1, bound1)
    w2 = jax.random.uniform(k3, (4, 64), jnp.float32, -bound2, bound2)
    b2 = jax.random.uniform(k4, (4,), jnp.float32, -bound2, bound2)
    return w1, b1, w2, b2


if __name__ == "__main__":
    key = jax.random.PRNGKey(0)
    k_params, k1, k2, k3 = jax.random.split(key, 4)
    w1, b1, w2, b2 = init_params(k_params)

    def ref_fn(x):
        # Plain-JAX reference with torch semantics: relu(x @ W1^T + b1) @ W2^T + b2
        return jnp.maximum(x @ w1.T + b1, 0.0) @ w2.T + b2

    # Small shape consistent with the module (RL state dim = 4).
    x_small = jax.random.normal(k1, (8, 4), jnp.float32)
    out_small = jax.block_until_ready(dqn_forward(x_small, w1, b1, w2, b2))
    assert out_small.shape == (8, 4)
    assert jnp.allclose(out_small, ref_fn(x_small), atol=1e-5, rtol=1e-5)

    # Multi-step batch grid with a small tile (grid=(3,), lane_chunk=128).
    x_mid = jax.random.normal(k2, (384, 4), jnp.float32)
    out_mid = jax.block_until_ready(dqn_forward(x_mid, w1, b1, w2, b2, block_b=128))
    assert out_mid.shape == (384, 4)
    assert jnp.allclose(out_mid, ref_fn(x_mid), atol=1e-5, rtol=1e-5)

    # Non-multiple-of-tile batch with the default config, via the transpose-free
    # calling convention (exercises padding, the >=2-grid-step megacore split,
    # and the in-kernel lane-chunk loop).
    x_big = jax.random.normal(k3, (1000, 4), jnp.float32)
    outT_big = jax.block_until_ready(dqn_forward_t(x_big.T, w1, b1, w2, b2))
    assert outT_big.shape == (4, 1000)
    assert jnp.allclose(outT_big.T, ref_fn(x_big), atol=1e-5, rtol=1e-5)

    # Optional layer-1-on-MXU path (use only if profiling shows VALU is binding).
    out_mxu = jax.block_until_ready(
        dqn_forward(x_mid, w1, b1, w2, b2, layer1_on_mxu=True))
    assert jnp.allclose(out_mxu, ref_fn(x_mid), atol=1e-5, rtol=1e-5)

    # TODO(synk): bf16_io=True halves activation DMA on v6e/v7x but relaxes the
    # 1e-5 tolerance, so it is not asserted here.
    print("KERNEL_OK")
</pallas_src>

<mosaic_0001>
module attributes {stable_mosaic.version = 11 : i64} {
  func.func @dqn_kernel(%arg0: i32, %arg1: memref<4x128xf32, #tpu.memory_space<vmem>>, %arg2: memref<64x4xf32, #tpu.memory_space<vmem>>, %arg3: memref<64x1xf32, #tpu.memory_space<vmem>>, %arg4: memref<4x64xf32, #tpu.memory_space<vmem>>, %arg5: memref<4x1xf32, #tpu.memory_space<vmem>>, %arg6: memref<4x128xf32, #tpu.memory_space<vmem>>) attributes {dimension_semantics = [#tpu.dimension_semantics<parallel>], iteration_bounds = array<i64: 1>, scalar_prefetch = 0 : i64, scratch_operands = 0 : i64, tpu.core_type = #tpu.core_type<tc>, window_params = [{transform_indices = @transform_0, window_bounds = array<i64: 4, 128>}, {pipeline_mode = #tpu.pipeline_mode<synchronous>, transform_indices = @transform_1, window_bounds = array<i64: 64, 4>}, {pipeline_mode = #tpu.pipeline_mode<synchronous>, transform_indices = @transform_2, window_bounds = array<i64: 64, 1>}, {pipeline_mode = #tpu.pipeline_mode<synchronous>, transform_indices = @transform_3, window_bounds = array<i64: 4, 64>}, {pipeline_mode = #tpu.pipeline_mode<synchronous>, transform_indices = @transform_4, window_bounds = array<i64: 4, 1>}, {transform_indices = @transform_5, window_bounds = array<i64: 4, 128>}]} {
    %c0 = arith.constant 0 : index
    %c0_0 = arith.constant 0 : index
    %0 = vector.load %arg2[%c0, %c0_0] : memref<64x4xf32, #tpu.memory_space<vmem>>, vector<64x4xf32>
    %1 = vector.extract_strided_slice %0 {offsets = [0, 0], sizes = [64, 1], strides = [1, 1]} : vector<64x4xf32> to vector<64x1xf32>
    %2 = vector.extract_strided_slice %0 {offsets = [0, 1], sizes = [64, 1], strides = [1, 1]} : vector<64x4xf32> to vector<64x1xf32>
    %3 = vector.extract_strided_slice %0 {offsets = [0, 2], sizes = [64, 1], strides = [1, 1]} : vector<64x4xf32> to vector<64x1xf32>
    %4 = vector.extract_strided_slice %0 {offsets = [0, 3], sizes = [64, 1], strides = [1, 1]} : vector<64x4xf32> to vector<64x1xf32>
    %c0_1 = arith.constant 0 : index
    %c0_2 = arith.constant 0 : index
    %5 = vector.load %arg3[%c0_1, %c0_2] : memref<64x1xf32, #tpu.memory_space<vmem>>, vector<64x1xf32>
    %c0_3 = arith.constant 0 : index
    %c0_4 = arith.constant 0 : index
    %6 = vector.load %arg4[%c0_3, %c0_4] : memref<4x64xf32, #tpu.memory_space<vmem>>, vector<4x64xf32>
    %c0_5 = arith.constant 0 : index
    %c0_6 = arith.constant 0 : index
    %7 = vector.load %arg5[%c0_5, %c0_6] : memref<4x1xf32, #tpu.memory_space<vmem>>, vector<4x1xf32>
    %c0_i32 = arith.constant 0 : i32
    %c128_i32 = arith.constant 128 : i32
    %8 = arith.muli %c0_i32, %c128_i32 : i32
    %9 = tpu.assume_multiple %8, 128 : i32
    %c0_7 = arith.constant 0 : index
    %10 = arith.index_cast %9 : i32 to index
    %11 = vector.load %arg1[%c0_7, %10] : memref<4x128xf32, #tpu.memory_space<vmem>>, vector<4x128xf32>
    %12 = vector.extract_strided_slice %11 {offsets = [0, 0], sizes = [1, 128], strides = [1, 1]} : vector<4x128xf32> to vector<1x128xf32>
    %13 = vector.broadcast %1 : vector<64x1xf32> to vector<64x128xf32>
    %14 = vector.broadcast %12 : vector<1x128xf32> to vector<64x128xf32>
    %15 = arith.mulf %13, %14 : vector<64x128xf32>
    %16 = vector.extract_strided_slice %11 {offsets = [1, 0], sizes = [1, 128], strides = [1, 1]} : vector<4x128xf32> to vector<1x128xf32>
    %17 = vector.broadcast %2 : vector<64x1xf32> to vector<64x128xf32>
    %18 = vector.broadcast %16 : vector<1x128xf32> to vector<64x128xf32>
    %19 = arith.mulf %17, %18 : vector<64x128xf32>
    %20 = arith.addf %15, %19 : vector<64x128xf32>
    %21 = vector.extract_strided_slice %11 {offsets = [2, 0], sizes = [1, 128], strides = [1, 1]} : vector<4x128xf32> to vector<1x128xf32>
    %22 = vector.broadcast %3 : vector<64x1xf32> to vector<64x128xf32>
    %23 = vector.broadcast %21 : vector<1x128xf32> to vector<64x128xf32>
    %24 = arith.mulf %22, %23 : vector<64x128xf32>
    %25 = arith.addf %20, %24 : vector<64x128xf32>
    %26 = vector.extract_strided_slice %11 {offsets = [3, 0], sizes = [1, 128], strides = [1, 1]} : vector<4x128xf32> to vector<1x128xf32>
    %27 = vector.broadcast %4 : vector<64x1xf32> to vector<64x128xf32>
    %28 = vector.broadcast %26 : vector<1x128xf32> to vector<64x128xf32>
    %29 = arith.mulf %27, %28 : vector<64x128xf32>
    %30 = arith.addf %25, %29 : vector<64x128xf32>
    %31 = vector.broadcast %5 : vector<64x1xf32> to vector<64x128xf32>
    %32 = arith.addf %30, %31 : vector<64x128xf32>
    %cst = arith.constant 0.000000e+00 : f32
    %33 = vector.broadcast %cst : f32 to vector<64x128xf32>
    %34 = arith.maximumf %32, %33 : vector<64x128xf32>
    %cst_8 = arith.constant dense<0.000000e+00> : vector<4x128xf32>
    %35 = tpu.matmul %6, %34, %cst_8 {dimension_numbers = #tpu.dot_dimension_numbers<[1], [0], [0], [1], [0, 0, 1, 1], [], []>} : vector<4x64xf32>, vector<64x128xf32>, vector<4x128xf32> -> vector<4x128xf32>
    %36 = vector.broadcast %7 : vector<4x1xf32> to vector<4x128xf32>
    %37 = arith.addf %35, %36 : vector<4x128xf32>
    %c0_9 = arith.constant 0 : index
    %38 = arith.index_cast %9 : i32 to index
    %39 = vector.load %arg6[%c0_9, %38] : memref<4x128xf32, #tpu.memory_space<vmem>>, vector<4x128xf32>
    tpu.vector_store %arg6[%c0_9, %38], %37 {strides = array<i32>} : memref<4x128xf32, #tpu.memory_space<vmem>>, vector<4x128xf32>,
    %c1_i32 = arith.constant 1 : i32
    return
  }
  func.func @transform_0(%arg0: i32) -> (i32, i32) {
    %c0_i32 = arith.constant 0 : i32
    %c0_i32_0 = arith.constant 0 : i32
    return %c0_i32, %arg0 : i32, i32
  }
  func.func @transform_1(%arg0: i32) -> (i32, i32) {
    %c0_i32 = arith.constant 0 : i32
    %c0_i32_0 = arith.constant 0 : i32
    %c0_i32_1 = arith.constant 0 : i32
    return %c0_i32, %c0_i32_0 : i32, i32
  }
  func.func @transform_2(%arg0: i32) -> (i32, i32) {
    %c0_i32 = arith.constant 0 : i32
    %c0_i32_0 = arith.constant 0 : i32
    %c0_i32_1 = arith.constant 0 : i32
    return %c0_i32, %c0_i32_0 : i32, i32
  }
  func.func @transform_3(%arg0: i32) -> (i32, i32) {
    %c0_i32 = arith.constant 0 : i32
    %c0_i32_0 = arith.constant 0 : i32
    %c0_i32_1 = arith.constant 0 : i32
    return %c0_i32, %c0_i32_0 : i32, i32
  }
  func.func @transform_4(%arg0: i32) -> (i32, i32) {
    %c0_i32 = arith.constant 0 : i32
    %c0_i32_0 = arith.constant 0 : i32
    %c0_i32_1 = arith.constant 0 : i32
    return %c0_i32, %c0_i32_0 : i32, i32
  }
  func.func @transform_5(%arg0: i32) -> (i32, i32) {
    %c0_i32 = arith.constant 0 : i32
    %c0_i32_0 = arith.constant 0 : i32
    return %c0_i32, %arg0 : i32, i32
  }
}

</mosaic_0001>

<llo_original>
// kernel: tpu_custom_call.1
$region0: #{tpu_custom_call.1}
  #allocation0 [shape = 'u32[]', space=smem, size = 0x4, offset = 0x4, fixed_abs, tag = 'smem constant byte address 0x4 - core index']
  #allocation1 [shape = 'u32[144,128]{1,0:T(1,128)}', space=vmem, size = 0x12000, scoped, tag = 'internal scratch']
  %s0 = inlined_call_operand.vmem [shape: f32[4,128], index: 0, kind: input, shape index: {}]
  %s1 = inlined_call_operand.vmem [shape: f32[64,4], index: 1, kind: input, shape index: {}]
  %s2 = inlined_call_operand.vmem [shape: f32[64,1], index: 2, kind: input, shape index: {}]
  %s3 = inlined_call_operand.vmem [shape: f32[4,64], index: 3, kind: input, shape index: {}]
  %s4 = inlined_call_operand.vmem [shape: f32[4,1], index: 4, kind: input, shape index: {}]
  %s5 = inlined_call_operand.hbm [shape: f32[4,128], index: 5, kind: output, shape index: {}]
  %s6 = sld [smem:[#allocation0]]
  $region30: #{tpu_custom_call.1} parent=0
    _
  %s8 = ssub.s32 1, %s6
  %s9 = scalar_select 0, %s8, %s6
  $region1: #{tpu_custom_call.1} parent=0
    #allocation2 [shape = 'u8[2048]{0}', space=vmem, size = 0x800, scoped, tag = 'output window, operand 0, single buffered']
    #allocation3 [shape = 's32[1]{0}', space=sflag, size = 0x4, scoped, tag = 'scoped memory for tpu_custom_call.1']
    %10 = vsyncpa [#allocation3], 0
    // Predicated region
    $region2: #{tpu_custom_call.1} parent=1 // pred_check
      _
    $region3: #{tpu_custom_call.1} parent=1 // pred_check_branch
      %12 = sbr.rel (0) target = $region5
    $region4: #{tpu_custom_call.1} parent=1 // pred_region
      _
    $region5: #{tpu_custom_call.1} parent=1 // pred_fallthru
      _
    // Predicated region
    $region6: #{tpu_custom_call.1} parent=1 // pred_check
      _
    $region7: #{tpu_custom_call.1} parent=1 // pred_check_branch
      %14 = sbr.rel (0) target = $region9
    $region8: #{tpu_custom_call.1} parent=1 // pred_region
      _
    $region9: #{tpu_custom_call.1} parent=1 // pred_fallthru
      _
    // Predicated region
    $region10: #{tpu_custom_call.1} parent=1 // pred_check
      _
    $region11: #{tpu_custom_call.1} parent=1 // pred_check_branch
      %16 = sbr.rel (0) target = $region13
    $region12: #{tpu_custom_call.1} parent=1 // pred_region
      _
    $region13: #{tpu_custom_call.1} parent=1 // pred_fallthru
      _
    // Predicated region
    $region14: #{tpu_custom_call.1} parent=1 // pred_check
      _
    $region15: #{tpu_custom_call.1} parent=1 // pred_check_branch
      %18 = sbr.rel (0) target = $region17
    $region16: #{tpu_custom_call.1} parent=1 // pred_region
      _
    $region17: #{tpu_custom_call.1} parent=1 // pred_fallthru
      _
    // Predicated region
    $region18: #{tpu_custom_call.1} parent=1 // pred_check
      _
    $region19: #{tpu_custom_call.1} parent=1 // pred_check_branch
      %20 = sbr.rel (0) target = $region21
    $region20: #{tpu_custom_call.1} parent=1 // pred_region
      _
    $region21: #{tpu_custom_call.1} parent=1 // pred_fallthru
      _
    %v21 = vld [vmem:[%s1] sm:$0xff]
    %v22 = vld [vmem:[%s1 + $0x8] sm:$0xff]
    %v23 = vld [vmem:[%s1 + $0x10] sm:$0xff]
    %v24 = vld [vmem:[%s1 + $0x18] sm:$0xff]
    %v25 = vld [vmem:[%s1 + $0x20] sm:$0xff]
    %v26 = vld [vmem:[%s1 + $0x28] sm:$0xff]
    %v27 = vld [vmem:[%s1 + $0x30] sm:$0xff]
    %v28 = vld [vmem:[%s1 + $0x38] sm:$0xff]
    %v29 = vld [vmem:[%s2] sm:$0xff]
    %v30 = vld [vmem:[%s2 + $0x8] sm:$0xff]
    %v31 = vld [vmem:[%s2 + $0x10] sm:$0xff]
    %v32 = vld [vmem:[%s2 + $0x18] sm:$0xff]
    %v33 = vld [vmem:[%s2 + $0x20] sm:$0xff]
    %v34 = vld [vmem:[%s2 + $0x28] sm:$0xff]
    %v35 = vld [vmem:[%s2 + $0x30] sm:$0xff]
    %v36 = vld [vmem:[%s2 + $0x38] sm:$0xff]
    %v37 = vld [vmem:[%s3] sm:$0xf]
    %v38 = vld [vmem:[%s4] sm:$0xf]
    %v39 = vld [vmem:[%s0] sm:$0xf]
    %41 = vset.pattern.permute.xlu0 0
    %42 = vperm.xlu0 %41, %v21
    %v43 = vpop.permute.xlu0 %42
    %46 = vset.pattern.permute.xlu0 0
    %47 = vperm.xlu0 %46, %v22
    %v48 = vpop.permute.xlu0 %47
    %51 = vset.pattern.permute.xlu0 0
    %52 = vperm.xlu0 %51, %v23
    %v53 = vpop.permute.xlu0 %52
    %56 = vset.pattern.permute.xlu0 0
    %57 = vperm.xlu0 %56, %v24
    %v58 = vpop.permute.xlu0 %57
    %61 = vset.pattern.permute.xlu0 0
    %62 = vperm.xlu0 %61, %v25
    %v63 = vpop.permute.xlu0 %62
    %66 = vset.pattern.permute.xlu0 0
    %67 = vperm.xlu0 %66, %v26
    %v68 = vpop.permute.xlu0 %67
    %71 = vset.pattern.permute.xlu0 0
    %72 = vperm.xlu0 %71, %v27
    %v73 = vpop.permute.xlu0 %72
    %76 = vset.pattern.permute.xlu0 0
    %77 = vperm.xlu0 %76, %v28
    %v78 = vpop.permute.xlu0 %77
    %v80 = vlaneseq
    %v81 = vshrl.u32 %v80, 7
    %v82 = vsub.s32 0, %v81
    %v83 = vrot.slane %v39, %v82
    %v84 = vmul.f32 %v43, %v83
    %v85 = vmul.f32 %v48, %v83
    %v86 = vmul.f32 %v53, %v83
    %v87 = vmul.f32 %v58, %v83
    %v88 = vmul.f32 %v63, %v83
    %v89 = vmul.f32 %v68, %v83
    %v90 = vmul.f32 %v73, %v83
    %v91 = vmul.f32 %v78, %v83
    %92 = vset.pattern.permute.xlu0 1
    %93 = vperm.xlu0 %92, %v21
    %v94 = vpop.permute.xlu0 %93
    %96 = vset.pattern.permute.xlu0 1
    %97 = vperm.xlu0 %96, %v22
    %v98 = vpop.permute.xlu0 %97
    %100 = vset.pattern.permute.xlu0 1
    %101 = vperm.xlu0 %100, %v23
    %v102 = vpop.permute.xlu0 %101
    %104 = vset.pattern.permute.xlu0 1
    %105 = vperm.xlu0 %104, %v24
    %v106 = vpop.permute.xlu0 %105
    %108 = vset.pattern.permute.xlu0 1
    %109 = vperm.xlu0 %108, %v25
    %v110 = vpop.permute.xlu0 %109
    %112 = vset.pattern.permute.xlu0 1
    %113 = vperm.xlu0 %112, %v26
    %v114 = vpop.permute.xlu0 %113
    %116 = vset.pattern.permute.xlu0 1
    %117 = vperm.xlu0 %116, %v27
    %v118 = vpop.permute.xlu0 %117
    %120 = vset.pattern.permute.xlu0 1
    %121 = vperm.xlu0 %120, %v28
    %v122 = vpop.permute.xlu0 %121
    %v124 = vlaneseq
    %v125 = vshrl.u32 %v124, 7
    %v126 = vsub.s32 1, %v125
    %v127 = vrot.slane %v39, %v126
    %v128 = vmul.f32 %v94, %v127
    %v129 = vmul.f32 %v98, %v127
    %v130 = vmul.f32 %v102, %v127
    %v131 = vmul.f32 %v106, %v127
    %v132 = vmul.f32 %v110, %v127
    %v133 = vmul.f32 %v114, %v127
    %v134 = vmul.f32 %v118, %v127
    %v135 = vmul.f32 %v122, %v127
    %v136 = vadd.f32 %v84, %v128
    %v137 = vadd.f32 %v85, %v129
    %v138 = vadd.f32 %v86, %v130
    %v139 = vadd.f32 %v87, %v131
    %v140 = vadd.f32 %v88, %v132
    %v141 = vadd.f32 %v89, %v133
    %v142 = vadd.f32 %v90, %v134
    %v143 = vadd.f32 %v91, %v135
    %144 = vset.pattern.permute.xlu0 2
    %145 = vperm.xlu0 %144, %v21
    %v146 = vpop.permute.xlu0 %145
    %148 = vset.pattern.permute.xlu0 2
    %149 = vperm.xlu0 %148, %v22
    %v150 = vpop.permute.xlu0 %149
    %152 = vset.pattern.permute.xlu0 2
    %153 = vperm.xlu0 %152, %v23
    %v154 = vpop.permute.xlu0 %153
    %156 = vset.pattern.permute.xlu0 2
    %157 = vperm.xlu0 %156, %v24
    %v158 = vpop.permute.xlu0 %157
    %160 = vset.pattern.permute.xlu0 2
    %161 = vperm.xlu0 %160, %v25
    %v162 = vpop.permute.xlu0 %161
    %164 = vset.pattern.permute.xlu0 2
    %165 = vperm.xlu0 %164, %v26
    %v166 = vpop.permute.xlu0 %165
    %168 = vset.pattern.permute.xlu0 2
    %169 = vperm.xlu0 %168, %v27
    %v170 = vpop.permute.xlu0 %169
    %172 = vset.pattern.permute.xlu0 2
    %173 = vperm.xlu0 %172, %v28
    %v174 = vpop.permute.xlu0 %173
    %v176 = vlaneseq
    %v177 = vshrl.u32 %v176, 7
    %v178 = vsub.s32 2, %v177
    %v179 = vrot.slane %v39, %v178
    %v180 = vmul.f32 %v146, %v179
    %v181 = vmul.f32 %v150, %v179
    %v182 = vmul.f32 %v154, %v179
    %v183 = vmul.f32 %v158, %v179
    %v184 = vmul.f32 %v162, %v179
    %v185 = vmul.f32 %v166, %v179
    %v186 = vmul.f32 %v170, %v179
    %v187 = vmul.f32 %v174, %v179
    %v188 = vadd.f32 %v136, %v180
    %v189 = vadd.f32 %v137, %v181
    %v190 = vadd.f32 %v138, %v182
    %v191 = vadd.f32 %v139, %v183
    %v192 = vadd.f32 %v140, %v184
    %v193 = vadd.f32 %v141, %v185
    %v194 = vadd.f32 %v142, %v186
    %v195 = vadd.f32 %v143, %v187
    %196 = vset.pattern.permute.xlu0 3
    %197 = vperm.xlu0 %196, %v21
    %v198 = vpop.permute.xlu0 %197
    %200 = vset.pattern.permute.xlu0 3
    %201 = vperm.xlu0 %200, %v22
    %v202 = vpop.permute.xlu0 %201
    %204 = vset.pattern.permute.xlu0 3
    %205 = vperm.xlu0 %204, %v23
    %v206 = vpop.permute.xlu0 %205
    %208 = vset.pattern.permute.xlu0 3
    %209 = vperm.xlu0 %208, %v24
    %v210 = vpop.permute.xlu0 %209
    %212 = vset.pattern.permute.xlu0 3
    %213 = vperm.xlu0 %212, %v25
    %v214 = vpop.permute.xlu0 %213
    %216 = vset.pattern.permute.xlu0 3
    %217 = vperm.xlu0 %216, %v26
    %v218 = vpop.permute.xlu0 %217
    %220 = vset.pattern.permute.xlu0 3
    %221 = vperm.xlu0 %220, %v27
    %v222 = vpop.permute.xlu0 %221
    %224 = vset.pattern.permute.xlu0 3
    %225 = vperm.xlu0 %224, %v28
    %v226 = vpop.permute.xlu0 %225
    %v228 = vlaneseq
    %v229 = vshrl.u32 %v228, 7
    %v230 = vsub.s32 3, %v229
    %v231 = vrot.slane %v39, %v230
    %v232 = vmul.f32 %v198, %v231
    %v233 = vmul.f32 %v202, %v231
    %v234 = vmul.f32 %v206, %v231
    %v235 = vmul.f32 %v210, %v231
    %v236 = vmul.f32 %v214, %v231
    %v237 = vmul.f32 %v218, %v231
    %v238 = vmul.f32 %v222, %v231
    %v239 = vmul.f32 %v226, %v231
    %v240 = vadd.f32 %v188, %v232
    %v241 = vadd.f32 %v189, %v233
    %v242 = vadd.f32 %v190, %v234
    %v243 = vadd.f32 %v191, %v235
    %v244 = vadd.f32 %v192, %v236
    %v245 = vadd.f32 %v193, %v237
    %v246 = vadd.f32 %v194, %v238
    %v247 = vadd.f32 %v195, %v239
    %249 = vset.pattern.permute.xlu0 0
    %250 = vperm.xlu0 %249, %v29
    %v251 = vpop.permute.xlu0 %250
    %254 = vset.pattern.permute.xlu0 0
    %255 = vperm.xlu0 %254, %v30
    %v256 = vpop.permute.xlu0 %255
    %259 = vset.pattern.permute.xlu0 0
    %260 = vperm.xlu0 %259, %v31
    %v261 = vpop.permute.xlu0 %260
    %264 = vset.pattern.permute.xlu0 0
    %265 = vperm.xlu0 %264, %v32
    %v266 = vpop.permute.xlu0 %265
    %269 = vset.pattern.permute.xlu0 0
    %270 = vperm.xlu0 %269, %v33
    %v271 = vpop.permute.xlu0 %270
    %274 = vset.pattern.permute.xlu0 0
    %275 = vperm.xlu0 %274, %v34
    %v276 = vpop.permute.xlu0 %275
    %279 = vset.pattern.permute.xlu0 0
    %280 = vperm.xlu0 %279, %v35
    %v281 = vpop.permute.xlu0 %280
    %284 = vset.pattern.permute.xlu0 0
    %285 = vperm.xlu0 %284, %v36
    %v286 = vpop.permute.xlu0 %285
    %v288 = vadd.f32 %v240, %v251
    %v289 = vadd.f32 %v241, %v256
    %v290 = vadd.f32 %v242, %v261
    %v291 = vadd.f32 %v243, %v266
    %v292 = vadd.f32 %v244, %v271
    %v293 = vadd.f32 %v245, %v276
    %v294 = vadd.f32 %v246, %v281
    %v295 = vadd.f32 %v247, %v286
    %v296 = vmax.f32 %v288, 0.0
    %v297 = vmax.f32 %v289, 0.0
    %v298 = vmax.f32 %v290, 0.0
    %v299 = vmax.f32 %v291, 0.0
    %v300 = vmax.f32 %v292, 0.0
    %v301 = vmax.f32 %v293, 0.0
    %v302 = vmax.f32 %v294, 0.0
    %v303 = vmax.f32 %v295, 0.0
    %305 = vset.pattern.permute.xlu0 0
    %306 = vperm.xlu0 %305, %v38
    %v307 = vpop.permute.xlu0 %306
    %vm309 = vcmask 523264
    %v311 = vsel %vm309, %v37, 0
    %313 = vmatprep.subr.mxu0 0.0
    %314 = vmatpush1.msra.mxu0 %v296
    %315 = vmatprep.subr.mxu0 0.0
    %316 = vmatpush1.msra.mxu0 %v297
    %317 = vmatprep.subr.mxu0 0.0
    %318 = vmatpush1.msra.mxu0 %v298
    %319 = vmatprep.subr.mxu0 0.0
    %320 = vmatpush1.msra.mxu0 %v299
    %321 = vmatprep.subr.mxu0 0.0
    %322 = vmatpush1.msra.mxu0 %v300
    %323 = vmatprep.subr.mxu0 0.0
    %324 = vmatpush1.msra.mxu0 %v301
    %325 = vmatprep.subr.mxu0 0.0
    %326 = vmatpush1.msra.mxu0 %v302
    %327 = vmatprep.subr.mxu0 0.0
    %328 = vmatpush1.msra.mxu0 %v303
    %329 = vmatprep.subr.mxu0 0.0
    %330 = vmatpush1.msra.mxu0 0.0
    %331 = vmatprep.subr.mxu0 0.0
    %332 = vmatpush1.msra.mxu0 0.0
    %333 = vmatprep.subr.mxu0 0.0
    %334 = vmatpush1.msra.mxu0 0.0
    %335 = vmatprep.subr.mxu0 0.0
    %336 = vmatpush1.msra.mxu0 0.0
    %337 = vmatprep.subr.mxu0 0.0
    %338 = vmatpush1.msra.mxu0 0.0
    %339 = vmatprep.subr.mxu0 0.0
    %340 = vmatpush1.msra.mxu0 0.0
    %341 = vmatprep.subr.mxu0 0.0
    %342 = vmatpush1.msra.mxu0 0.0
    %343 = vmatprep.subr.mxu0 0.0
    %344 = vmatpush1.msra.mxu0 0.0
    %345 = vmatprep.subr.mxu0 0.0
    %346 = vmatpush1.msra.mxu0 0.0
    %347 = vmatprep.subr.mxu0 0.0
    %348 = vmatpush1.msra.mxu0 0.0
    %349 = vmatprep.subr.mxu0 0.0
    %350 = vmatpush1.msra.mxu0 0.0
    %351 = vmatprep.subr.mxu0 0.0
    %352 = vmatpush1.msra.mxu0 0.0
    %353 = vmatprep.subr.mxu0 0.0
    %354 = vmatpush1.msra.mxu0 0.0
    %355 = vmatprep.subr.mxu0 0.0
    %356 = vmatpush1.msra.mxu0 0.0
    %357 = vmatprep.subr.mxu0 0.0
    %358 = vmatpush1.msra.mxu0 0.0
    %359 = vmatprep.subr.mxu0 0.0
    %360 = vmatpush1.msra.mxu0 0.0
    %361 = vmatprep.subr.mxu0 0.0
    %362 = vmatpush1.msra.mxu0 0.0
    %363 = vmatprep.subr.mxu0 0.0
    %364 = vmatpush1.msra.mxu0 0.0
    %365 = vmatprep.subr.mxu0 0.0
    %366 = vmatpush1.msra.mxu0 0.0
    %367 = vmatprep.subr.mxu0 0.0
    %368 = vmatpush1.msra.mxu0 0.0
    %369 = vmatprep.subr.mxu0 0.0
    %370 = vmatpush1.msra.mxu0 0.0
    %371 = vmatprep.subr.mxu0 0.0
    %372 = vmatpush1.msra.mxu0 0.0
    %373 = vmatprep.subr.mxu0 0.0
    %374 = vmatpush1.msra.mxu0 0.0
    %375 = vmatprep.subr.mxu0 0.0
    %376 = vmatpush1.msra.mxu0 0.0
    %377 = vmatprep.mubr.f32.mxu0 0.0
    %378 = vmatmul.mubr.f32.gmra.mrb[0].mxu0 %v311
    %v379 = vpop.f32.mrb[0].mxu0
    %v380 = vadd.f32 %v307, %v379
    %v381 = vpop.f32.mrb[0].mxu0
    %382 = vdwg.mxu0
    %383 = vst [vmem:[#allocation2] sm:$0xf] %v380
    // Predicated region
    $region22: #{tpu_custom_call.1} parent=1 // pred_check
      _
    $region23: #{tpu_custom_call.1} parent=1 // pred_check_branch
      %385 = sbr.rel (0) target = $region25
    $region24: #{tpu_custom_call.1} parent=1 // pred_region
      %s387 = ssub.s32 64, 64
      %388 = vsyncadd [#allocation3], %s387
      %s390 = sshll.u32 [#allocation2], 4
      %s391 = int_to_ptr.vmem [resolvable:$true] %s390
      %393 = dma.vmem_to_hbm [thread:$0]  %s391, 64, %s5, [#allocation3]
    $region25: #{tpu_custom_call.1} parent=1 // pred_fallthru
      _
    // Predicated region
    $region26: #{tpu_custom_call.1} parent=1 // pred_check
      _
    $region27: #{tpu_custom_call.1} parent=1 // pred_check_branch
      %395 = sbr.rel (0) target = $region29
    $region28: #{tpu_custom_call.1} parent=1 // pred_region
      %396 = dma.done [#allocation3], 64
    $region29: #{tpu_custom_call.1} parent=1 // pred_fallthru
      _
    %397 = vsyncpa [#allocation3], 1

</llo_original>
